<compile_context>
chip_gen: v7x
topology: tpu7x:2x2x1
jax: 0.10.0
libtpu: 0.0.40
codegen_flags: <defaults>
</compile_context>

<pallas_src>
import functools

import numpy as np
import jax
import jax.numpy as jnp
from jax.experimental import pallas as pl
from jax.experimental.pallas import tpu as pltpu


def _conv3x3_kernel(x_ref, w_ref, b_ref, m_ref, o_ref, *, W):
    """3x3 'same' conv for one batch element, NCHW-flattened.

    x_ref: (1, Cin, H*W)   input: channels on sublanes, flat spatial on lanes
    w_ref: (9, Cout, Cin)  per-tap weights, tap t = kh*3 + kw
    b_ref: (Cout, 1)       bias
    m_ref: (9, Cout, H*W)  per-tap 0/1 boundary masks
    o_ref: (1, Cout, H*W)  lane-dense output (NCHW flattened)
    """
    hw = x_ref.shape[2]
    cout = o_ref.shape[1]
    x = x_ref[0]                                   # (Cin, H*W)

    acc = jnp.zeros((cout, hw), jnp.float32)       # 2 full-lane vregs
    for kh in range(3):                            # statically unrolled taps
        for kw in range(3):
            t = kh * 3 + kw
            dh, dw = kh - 1, kw - 1
            # Tap matmul on the MXU: (Cout, Cin) @ (Cin, H*W) -> (Cout, H*W).
            z = jnp.dot(w_ref[t], x, preferred_element_type=jnp.float32)
            off = dh * W + dw
            if off != 0:
                # shifted[:, q] = z[:, (q + off) % (H*W)]; wrapped / cross-row
                # lanes are zeroed by the boundary mask below.  Shifts the
                # small 3-channel result instead of the 64-channel input.
                z = jnp.roll(z, -off, axis=-1)
            if dh != 0 or dw != 0:
                z = z * m_ref[t]                   # zero out-of-image taps
            acc = acc + z
    acc = acc + b_ref[...]                         # (Cout, 1) lane-broadcast
    o_ref[0] = acc.astype(o_ref.dtype)


def prepare_weights(w_oihw):
    """(Cout, Cin, 3, 3) OIHW -> (9, Cout, Cin) tap-major weights."""
    cout, cin = w_oihw.shape[0], w_oihw.shape[1]
    return jnp.transpose(w_oihw, (2, 3, 0, 1)).reshape(9, cout, cin)


def make_tap_masks(H, W, Cout):
    """0/1 masks (9, Cout, H*W): mask[t, :, q] = 1 iff tap t reads inside the image."""
    q = np.arange(H * W)
    i_idx, j_idx = q // W, q % W
    masks = np.zeros((9, Cout, H * W), np.float32)
    for kh in range(3):
        for kw in range(3):
            dh, dw = kh - 1, kw - 1
            ok = ((i_idx + dh >= 0) & (i_idx + dh < H)
                  & (j_idx + dw >= 0) & (j_idx + dw < W))
            masks[kh * 3 + kw] = ok.astype(np.float32)[None, :]
    return jnp.asarray(masks)


def conv3x3_nchw(x_nchw, w_taps, bias, tap_masks):
    """x_nchw: (N, Cin, H, W) f32; w_taps: (9, Cout, Cin); bias: (Cout,);
    tap_masks: (9, Cout, H*W).  Returns (N, Cout, H, W)."""
    N, Cin, H, W = x_nchw.shape
    Cout = w_taps.shape[1]
    HW = H * W

    x_flat = x_nchw.reshape(N, Cin, HW)            # free: contiguous collapse
    b2d = bias.reshape(Cout, 1)

    out_flat = pl.pallas_call(
        functools.partial(_conv3x3_kernel, W=W),
        out_shape=jax.ShapeDtypeStruct((N, Cout, HW), x_nchw.dtype),
        grid=(N,),
        in_specs=[
            pl.BlockSpec((1, Cin, HW), lambda n: (n, 0, 0)),
            pl.BlockSpec((9, Cout, Cin), lambda n: (0, 0, 0)),
            pl.BlockSpec((Cout, 1), lambda n: (0, 0)),
            pl.BlockSpec((9, Cout, HW), lambda n: (0, 0, 0)),
        ],
        out_specs=pl.BlockSpec((1, Cout, HW), lambda n: (n, 0, 0)),
        compiler_params=pltpu.CompilerParams(
            dimension_semantics=("parallel",)),
    )(x_flat, w_taps, b2d, tap_masks)
    return out_flat.reshape(N, Cout, H, W)         # free: contiguous expand


def final_process_forward(input_list, w_taps, bias, tap_masks):
    """Reproduces final_process.forward: [conv(input_list[0]), input_list[1]]."""
    out = conv3x3_nchw(input_list[0], w_taps, bias, tap_masks)
    return [out, input_list[1]]


if __name__ == "__main__":
    key = jax.random.PRNGKey(0)
    k_x, k_aux, k_w, k_b = jax.random.split(key, 4)

    N, Cin, H, W = 2, 64, 16, 16   # Cin=64 fixed by the module definition
    Cout = 3

    x = jax.random.normal(k_x, (N, Cin, H, W), dtype=jnp.float32)
    aux = jax.random.normal(k_aux, (N, Cout, H, W), dtype=jnp.float32)

    # Deterministic synthetic parameters (shapes match nn.Conv2d(64, 3, 3, 1, 1))
    fan_in = Cin * 3 * 3
    bound = 1.0 / float(np.sqrt(fan_in))
    w_oihw = jax.random.uniform(
        k_w, (Cout, Cin, 3, 3), minval=-bound, maxval=bound, dtype=jnp.float32
    )
    bias = jax.random.uniform(
        k_b, (Cout,), minval=-bound, maxval=bound, dtype=jnp.float32
    )

    # One-time layout plumbing (outside the hot path)
    w_taps = prepare_weights(w_oihw)          # (9, Cout, Cin)
    tap_masks = make_tap_masks(H, W, Cout)    # (9, Cout, H*W)

    out_list = final_process_forward([x, aux], w_taps, bias, tap_masks)
    out = jax.block_until_ready(out_list[0])
    passthrough = jax.block_until_ready(out_list[1])

    # Sanity check against XLA's conv (same semantics as torch Conv2d pad=1)
    ref = jax.lax.conv_general_dilated(
        x, w_oihw, window_strides=(1, 1), padding=((1, 1), (1, 1)),
        dimension_numbers=("NCHW", "OIHW", "NCHW"),
    ) + bias.reshape(1, Cout, 1, 1)
    assert out.shape == (N, Cout, H, W)
    assert jnp.allclose(out, ref, atol=1e-4, rtol=1e-4)
    assert jnp.array_equal(passthrough, aux)

    print("KERNEL_OK")
</pallas_src>

<mosaic_0001>
module attributes {stable_mosaic.version = 11 : i64} {
  func.func @_conv3x3_kernel(%arg0: i32, %arg1: memref<1x64x256xf32, #tpu.memory_space<vmem>>, %arg2: memref<9x3x64xf32, #tpu.memory_space<vmem>>, %arg3: memref<3x1xf32, #tpu.memory_space<vmem>>, %arg4: memref<9x3x256xf32, #tpu.memory_space<vmem>>, %arg5: memref<1x3x256xf32, #tpu.memory_space<vmem>>) attributes {dimension_semantics = [#tpu.dimension_semantics<parallel>], iteration_bounds = array<i64: 2>, scalar_prefetch = 0 : i64, scratch_operands = 0 : i64, tpu.core_type = #tpu.core_type<tc>, window_params = [{transform_indices = @transform_0, window_bounds = array<i64: 1, 64, 256>}, {pipeline_mode = #tpu.pipeline_mode<synchronous>, transform_indices = @transform_1, window_bounds = array<i64: 9, 3, 64>}, {pipeline_mode = #tpu.pipeline_mode<synchronous>, transform_indices = @transform_2, window_bounds = array<i64: 3, 1>}, {pipeline_mode = #tpu.pipeline_mode<synchronous>, transform_indices = @transform_3, window_bounds = array<i64: 9, 3, 256>}, {transform_indices = @transform_4, window_bounds = array<i64: 1, 3, 256>}]} {
    %c0 = arith.constant 0 : index
    %c0_0 = arith.constant 0 : index
    %c0_1 = arith.constant 0 : index
    %0 = vector.load %arg1[%c0, %c0_0, %c0_1] : memref<1x64x256xf32, #tpu.memory_space<vmem>>, vector<1x64x256xf32>
    %1 = vector.shape_cast %0 : vector<1x64x256xf32> to vector<64x256xf32>
    %cst = arith.constant 0.000000e+00 : f32
    %2 = vector.broadcast %cst : f32 to vector<3x256xf32>
    %c0_2 = arith.constant 0 : index
    %c0_3 = arith.constant 0 : index
    %c0_4 = arith.constant 0 : index
    %3 = vector.load %arg2[%c0_2, %c0_3, %c0_4] : memref<9x3x64xf32, #tpu.memory_space<vmem>>, vector<1x3x64xf32>
    %4 = vector.shape_cast %3 : vector<1x3x64xf32> to vector<3x64xf32>
    %cst_5 = arith.constant dense<0.000000e+00> : vector<3x256xf32>
    %5 = tpu.matmul %4, %1, %cst_5 {dimension_numbers = #tpu.dot_dimension_numbers<[1], [0], [0], [1], [0, 0, 1, 1], [], []>} : vector<3x64xf32>, vector<64x256xf32>, vector<3x256xf32> -> vector<3x256xf32>
    %6 = vector.extract_strided_slice %5 {offsets = [0, 239], sizes = [3, 17], strides = [1, 1]} : vector<3x256xf32> to vector<3x17xf32>
    %7 = vector.extract_strided_slice %5 {offsets = [0, 0], sizes = [3, 239], strides = [1, 1]} : vector<3x256xf32> to vector<3x239xf32>
    %8 = tpu.concatenate %6, %7 in 1 : vector<3x17xf32>, vector<3x239xf32> -> vector<3x256xf32>
    %c0_6 = arith.constant 0 : index
    %c0_7 = arith.constant 0 : index
    %c0_8 = arith.constant 0 : index
    %9 = vector.load %arg4[%c0_6, %c0_7, %c0_8] : memref<9x3x256xf32, #tpu.memory_space<vmem>>, vector<1x3x256xf32>
    %10 = vector.shape_cast %9 : vector<1x3x256xf32> to vector<3x256xf32>
    %11 = arith.mulf %8, %10 : vector<3x256xf32>
    %12 = arith.addf %2, %11 : vector<3x256xf32>
    %c1 = arith.constant 1 : index
    %c0_9 = arith.constant 0 : index
    %c0_10 = arith.constant 0 : index
    %13 = vector.load %arg2[%c1, %c0_9, %c0_10] : memref<9x3x64xf32, #tpu.memory_space<vmem>>, vector<1x3x64xf32>
    %14 = vector.shape_cast %13 : vector<1x3x64xf32> to vector<3x64xf32>
    %cst_11 = arith.constant dense<0.000000e+00> : vector<3x256xf32>
    %15 = tpu.matmul %14, %1, %cst_11 {dimension_numbers = #tpu.dot_dimension_numbers<[1], [0], [0], [1], [0, 0, 1, 1], [], []>} : vector<3x64xf32>, vector<64x256xf32>, vector<3x256xf32> -> vector<3x256xf32>
    %16 = vector.extract_strided_slice %15 {offsets = [0, 240], sizes = [3, 16], strides = [1, 1]} : vector<3x256xf32> to vector<3x16xf32>
    %17 = vector.extract_strided_slice %15 {offsets = [0, 0], sizes = [3, 240], strides = [1, 1]} : vector<3x256xf32> to vector<3x240xf32>
    %18 = tpu.concatenate %16, %17 in 1 : vector<3x16xf32>, vector<3x240xf32> -> vector<3x256xf32>
    %c1_12 = arith.constant 1 : index
    %c0_13 = arith.constant 0 : index
    %c0_14 = arith.constant 0 : index
    %19 = vector.load %arg4[%c1_12, %c0_13, %c0_14] : memref<9x3x256xf32, #tpu.memory_space<vmem>>, vector<1x3x256xf32>
    %20 = vector.shape_cast %19 : vector<1x3x256xf32> to vector<3x256xf32>
    %21 = arith.mulf %18, %20 : vector<3x256xf32>
    %22 = arith.addf %12, %21 : vector<3x256xf32>
    %c2 = arith.constant 2 : index
    %c0_15 = arith.constant 0 : index
    %c0_16 = arith.constant 0 : index
    %23 = vector.load %arg2[%c2, %c0_15, %c0_16] : memref<9x3x64xf32, #tpu.memory_space<vmem>>, vector<1x3x64xf32>
    %24 = vector.shape_cast %23 : vector<1x3x64xf32> to vector<3x64xf32>
    %cst_17 = arith.constant dense<0.000000e+00> : vector<3x256xf32>
    %25 = tpu.matmul %24, %1, %cst_17 {dimension_numbers = #tpu.dot_dimension_numbers<[1], [0], [0], [1], [0, 0, 1, 1], [], []>} : vector<3x64xf32>, vector<64x256xf32>, vector<3x256xf32> -> vector<3x256xf32>
    %26 = vector.extract_strided_slice %25 {offsets = [0, 241], sizes = [3, 15], strides = [1, 1]} : vector<3x256xf32> to vector<3x15xf32>
    %27 = vector.extract_strided_slice %25 {offsets = [0, 0], sizes = [3, 241], strides = [1, 1]} : vector<3x256xf32> to vector<3x241xf32>
    %28 = tpu.concatenate %26, %27 in 1 : vector<3x15xf32>, vector<3x241xf32> -> vector<3x256xf32>
    %c2_18 = arith.constant 2 : index
    %c0_19 = arith.constant 0 : index
    %c0_20 = arith.constant 0 : index
    %29 = vector.load %arg4[%c2_18, %c0_19, %c0_20] : memref<9x3x256xf32, #tpu.memory_space<vmem>>, vector<1x3x256xf32>
    %30 = vector.shape_cast %29 : vector<1x3x256xf32> to vector<3x256xf32>
    %31 = arith.mulf %28, %30 : vector<3x256xf32>
    %32 = arith.addf %22, %31 : vector<3x256xf32>
    %c3 = arith.constant 3 : index
    %c0_21 = arith.constant 0 : index
    %c0_22 = arith.constant 0 : index
    %33 = vector.load %arg2[%c3, %c0_21, %c0_22] : memref<9x3x64xf32, #tpu.memory_space<vmem>>, vector<1x3x64xf32>
    %34 = vector.shape_cast %33 : vector<1x3x64xf32> to vector<3x64xf32>
    %cst_23 = arith.constant dense<0.000000e+00> : vector<3x256xf32>
    %35 = tpu.matmul %34, %1, %cst_23 {dimension_numbers = #tpu.dot_dimension_numbers<[1], [0], [0], [1], [0, 0, 1, 1], [], []>} : vector<3x64xf32>, vector<64x256xf32>, vector<3x256xf32> -> vector<3x256xf32>
    %36 = vector.extract_strided_slice %35 {offsets = [0, 255], sizes = [3, 1], strides = [1, 1]} : vector<3x256xf32> to vector<3x1xf32>
    %37 = vector.extract_strided_slice %35 {offsets = [0, 0], sizes = [3, 255], strides = [1, 1]} : vector<3x256xf32> to vector<3x255xf32>
    %38 = tpu.concatenate %36, %37 in 1 : vector<3x1xf32>, vector<3x255xf32> -> vector<3x256xf32>
    %c3_24 = arith.constant 3 : index
    %c0_25 = arith.constant 0 : index
    %c0_26 = arith.constant 0 : index
    %39 = vector.load %arg4[%c3_24, %c0_25, %c0_26] : memref<9x3x256xf32, #tpu.memory_space<vmem>>, vector<1x3x256xf32>
    %40 = vector.shape_cast %39 : vector<1x3x256xf32> to vector<3x256xf32>
    %41 = arith.mulf %38, %40 : vector<3x256xf32>
    %42 = arith.addf %32, %41 : vector<3x256xf32>
    %c4 = arith.constant 4 : index
    %c0_27 = arith.constant 0 : index
    %c0_28 = arith.constant 0 : index
    %43 = vector.load %arg2[%c4, %c0_27, %c0_28] : memref<9x3x64xf32, #tpu.memory_space<vmem>>, vector<1x3x64xf32>
    %44 = vector.shape_cast %43 : vector<1x3x64xf32> to vector<3x64xf32>
    %cst_29 = arith.constant dense<0.000000e+00> : vector<3x256xf32>
    %45 = tpu.matmul %44, %1, %cst_29 {dimension_numbers = #tpu.dot_dimension_numbers<[1], [0], [0], [1], [0, 0, 1, 1], [], []>} : vector<3x64xf32>, vector<64x256xf32>, vector<3x256xf32> -> vector<3x256xf32>
    %46 = arith.addf %42, %45 : vector<3x256xf32>
    %c5 = arith.constant 5 : index
    %c0_30 = arith.constant 0 : index
    %c0_31 = arith.constant 0 : index
    %47 = vector.load %arg2[%c5, %c0_30, %c0_31] : memref<9x3x64xf32, #tpu.memory_space<vmem>>, vector<1x3x64xf32>
    %48 = vector.shape_cast %47 : vector<1x3x64xf32> to vector<3x64xf32>
    %cst_32 = arith.constant dense<0.000000e+00> : vector<3x256xf32>
    %49 = tpu.matmul %48, %1, %cst_32 {dimension_numbers = #tpu.dot_dimension_numbers<[1], [0], [0], [1], [0, 0, 1, 1], [], []>} : vector<3x64xf32>, vector<64x256xf32>, vector<3x256xf32> -> vector<3x256xf32>
    %50 = vector.extract_strided_slice %49 {offsets = [0, 1], sizes = [3, 255], strides = [1, 1]} : vector<3x256xf32> to vector<3x255xf32>
    %51 = vector.extract_strided_slice %49 {offsets = [0, 0], sizes = [3, 1], strides = [1, 1]} : vector<3x256xf32> to vector<3x1xf32>
    %52 = tpu.concatenate %50, %51 in 1 : vector<3x255xf32>, vector<3x1xf32> -> vector<3x256xf32>
    %c5_33 = arith.constant 5 : index
    %c0_34 = arith.constant 0 : index
    %c0_35 = arith.constant 0 : index
    %53 = vector.load %arg4[%c5_33, %c0_34, %c0_35] : memref<9x3x256xf32, #tpu.memory_space<vmem>>, vector<1x3x256xf32>
    %54 = vector.shape_cast %53 : vector<1x3x256xf32> to vector<3x256xf32>
    %55 = arith.mulf %52, %54 : vector<3x256xf32>
    %56 = arith.addf %46, %55 : vector<3x256xf32>
    %c6 = arith.constant 6 : index
    %c0_36 = arith.constant 0 : index
    %c0_37 = arith.constant 0 : index
    %57 = vector.load %arg2[%c6, %c0_36, %c0_37] : memref<9x3x64xf32, #tpu.memory_space<vmem>>, vector<1x3x64xf32>
    %58 = vector.shape_cast %57 : vector<1x3x64xf32> to vector<3x64xf32>
    %cst_38 = arith.constant dense<0.000000e+00> : vector<3x256xf32>
    %59 = tpu.matmul %58, %1, %cst_38 {dimension_numbers = #tpu.dot_dimension_numbers<[1], [0], [0], [1], [0, 0, 1, 1], [], []>} : vector<3x64xf32>, vector<64x256xf32>, vector<3x256xf32> -> vector<3x256xf32>
    %60 = vector.extract_strided_slice %59 {offsets = [0, 15], sizes = [3, 241], strides = [1, 1]} : vector<3x256xf32> to vector<3x241xf32>
    %61 = vector.extract_strided_slice %59 {offsets = [0, 0], sizes = [3, 15], strides = [1, 1]} : vector<3x256xf32> to vector<3x15xf32>
    %62 = tpu.concatenate %60, %61 in 1 : vector<3x241xf32>, vector<3x15xf32> -> vector<3x256xf32>
    %c6_39 = arith.constant 6 : index
    %c0_40 = arith.constant 0 : index
    %c0_41 = arith.constant 0 : index
    %63 = vector.load %arg4[%c6_39, %c0_40, %c0_41] : memref<9x3x256xf32, #tpu.memory_space<vmem>>, vector<1x3x256xf32>
    %64 = vector.shape_cast %63 : vector<1x3x256xf32> to vector<3x256xf32>
    %65 = arith.mulf %62, %64 : vector<3x256xf32>
    %66 = arith.addf %56, %65 : vector<3x256xf32>
    %c7 = arith.constant 7 : index
    %c0_42 = arith.constant 0 : index
    %c0_43 = arith.constant 0 : index
    %67 = vector.load %arg2[%c7, %c0_42, %c0_43] : memref<9x3x64xf32, #tpu.memory_space<vmem>>, vector<1x3x64xf32>
    %68 = vector.shape_cast %67 : vector<1x3x64xf32> to vector<3x64xf32>
    %cst_44 = arith.constant dense<0.000000e+00> : vector<3x256xf32>
    %69 = tpu.matmul %68, %1, %cst_44 {dimension_numbers = #tpu.dot_dimension_numbers<[1], [0], [0], [1], [0, 0, 1, 1], [], []>} : vector<3x64xf32>, vector<64x256xf32>, vector<3x256xf32> -> vector<3x256xf32>
    %70 = vector.extract_strided_slice %69 {offsets = [0, 16], sizes = [3, 240], strides = [1, 1]} : vector<3x256xf32> to vector<3x240xf32>
    %71 = vector.extract_strided_slice %69 {offsets = [0, 0], sizes = [3, 16], strides = [1, 1]} : vector<3x256xf32> to vector<3x16xf32>
    %72 = tpu.concatenate %70, %71 in 1 : vector<3x240xf32>, vector<3x16xf32> -> vector<3x256xf32>
    %c7_45 = arith.constant 7 : index
    %c0_46 = arith.constant 0 : index
    %c0_47 = arith.constant 0 : index
    %73 = vector.load %arg4[%c7_45, %c0_46, %c0_47] : memref<9x3x256xf32, #tpu.memory_space<vmem>>, vector<1x3x256xf32>
    %74 = vector.shape_cast %73 : vector<1x3x256xf32> to vector<3x256xf32>
    %75 = arith.mulf %72, %74 : vector<3x256xf32>
    %76 = arith.addf %66, %75 : vector<3x256xf32>
    %c8 = arith.constant 8 : index
    %c0_48 = arith.constant 0 : index
    %c0_49 = arith.constant 0 : index
    %77 = vector.load %arg2[%c8, %c0_48, %c0_49] : memref<9x3x64xf32, #tpu.memory_space<vmem>>, vector<1x3x64xf32>
    %78 = vector.shape_cast %77 : vector<1x3x64xf32> to vector<3x64xf32>
    %cst_50 = arith.constant dense<0.000000e+00> : vector<3x256xf32>
    %79 = tpu.matmul %78, %1, %cst_50 {dimension_numbers = #tpu.dot_dimension_numbers<[1], [0], [0], [1], [0, 0, 1, 1], [], []>} : vector<3x64xf32>, vector<64x256xf32>, vector<3x256xf32> -> vector<3x256xf32>
    %80 = vector.extract_strided_slice %79 {offsets = [0, 17], sizes = [3, 239], strides = [1, 1]} : vector<3x256xf32> to vector<3x239xf32>
    %81 = vector.extract_strided_slice %79 {offsets = [0, 0], sizes = [3, 17], strides = [1, 1]} : vector<3x256xf32> to vector<3x17xf32>
    %82 = tpu.concatenate %80, %81 in 1 : vector<3x239xf32>, vector<3x17xf32> -> vector<3x256xf32>
    %c8_51 = arith.constant 8 : index
    %c0_52 = arith.constant 0 : index
    %c0_53 = arith.constant 0 : index
    %83 = vector.load %arg4[%c8_51, %c0_52, %c0_53] : memref<9x3x256xf32, #tpu.memory_space<vmem>>, vector<1x3x256xf32>
    %84 = vector.shape_cast %83 : vector<1x3x256xf32> to vector<3x256xf32>
    %85 = arith.mulf %82, %84 : vector<3x256xf32>
    %86 = arith.addf %76, %85 : vector<3x256xf32>
    %c0_54 = arith.constant 0 : index
    %c0_55 = arith.constant 0 : index
    %87 = vector.load %arg3[%c0_54, %c0_55] : memref<3x1xf32, #tpu.memory_space<vmem>>, vector<3x1xf32>
    %88 = vector.broadcast %87 : vector<3x1xf32> to vector<3x256xf32>
    %89 = arith.addf %86, %88 : vector<3x256xf32>
    %c0_56 = arith.constant 0 : index
    %c0_57 = arith.constant 0 : index
    %c0_58 = arith.constant 0 : index
    %90 = vector.load %arg5[%c0_56, %c0_57, %c0_58] : memref<1x3x256xf32, #tpu.memory_space<vmem>>, vector<1x3x256xf32>
    %91 = vector.shape_cast %90 : vector<1x3x256xf32> to vector<3x256xf32>
    %92 = vector.shape_cast %89 : vector<3x256xf32> to vector<1x3x256xf32>
    tpu.vector_store %arg5[%c0_56, %c0_57, %c0_58], %92 {strides = array<i32>} : memref<1x3x256xf32, #tpu.memory_space<vmem>>, vector<1x3x256xf32>,
    return
  }
  func.func @transform_0(%arg0: i32) -> (i32, i32, i32) {
    %c0_i32 = arith.constant 0 : i32
    %c0_i32_0 = arith.constant 0 : i32
    %c0_i32_1 = arith.constant 0 : i32
    return %arg0, %c0_i32, %c0_i32_0 : i32, i32, i32
  }
  func.func @transform_1(%arg0: i32) -> (i32, i32, i32) {
    %c0_i32 = arith.constant 0 : i32
    %c0_i32_0 = arith.constant 0 : i32
    %c0_i32_1 = arith.constant 0 : i32
    %c0_i32_2 = arith.constant 0 : i32
    return %c0_i32, %c0_i32_0, %c0_i32_1 : i32, i32, i32
  }
  func.func @transform_2(%arg0: i32) -> (i32, i32) {
    %c0_i32 = arith.constant 0 : i32
    %c0_i32_0 = arith.constant 0 : i32
    %c0_i32_1 = arith.constant 0 : i32
    return %c0_i32, %c0_i32_0 : i32, i32
  }
  func.func @transform_3(%arg0: i32) -> (i32, i32, i32) {
    %c0_i32 = arith.constant 0 : i32
    %c0_i32_0 = arith.constant 0 : i32
    %c0_i32_1 = arith.constant 0 : i32
    %c0_i32_2 = arith.constant 0 : i32
    return %c0_i32, %c0_i32_0, %c0_i32_1 : i32, i32, i32
  }
  func.func @transform_4(%arg0: i32) -> (i32, i32, i32) {
    %c0_i32 = arith.constant 0 : i32
    %c0_i32_0 = arith.constant 0 : i32
    %c0_i32_1 = arith.constant 0 : i32
    return %arg0, %c0_i32, %c0_i32_0 : i32, i32, i32
  }
}

</mosaic_0001>

<llo_original>
// kernel: tpu_custom_call.1
$region0: #{tpu_custom_call.1}
  #allocation0 [shape = 'u32[]', space=smem, size = 0x4, offset = 0x4, fixed_abs, tag = 'smem constant byte address 0x4 - core index']
  #allocation1 [shape = 'u32[144,128]{1,0:T(1,128)}', space=vmem, size = 0x12000, scoped, tag = 'internal scratch']
  %s0 = inlined_call_operand.hbm [shape: f32[2,64,256], index: 0, kind: input, shape index: {}]
  %s1 = inlined_call_operand.hbm [shape: f32[9,3,64], index: 1, kind: input, shape index: {}]
  %s2 = inlined_call_operand.vmem [shape: f32[3,1], index: 2, kind: input, shape index: {}]
  %s3 = inlined_call_operand.hbm [shape: f32[9,3,256], index: 3, kind: input, shape index: {}]
  %s4 = inlined_call_operand.vmem [shape: f32[2,3,256], index: 4, kind: output, shape index: {}]
  %s5 = sld [smem:[#allocation0]]
  $region61: #{tpu_custom_call.1} parent=0
    _
  %s7 = ssub.s32 1, %s5
  %s8 = scalar_select 0, %s7, %s5
  $region1: #{tpu_custom_call.1} parent=0
    #allocation2 [shape = 'u8[131072]{0}', space=vmem, size = 0x20000, scoped, tag = 'input window, operand 0']
    #allocation3 [shape = 's32[2]{0}', space=sflag, size = 0x8, scoped, tag = 'scoped memory for tpu_custom_call.1']
    #allocation4 [shape = 'u8[18432]{0}', space=vmem, size = 0x4800, scoped, tag = 'input window, operand 1, single buffered']
    #allocation5 [shape = 's32[1]{0}', space=sflag, size = 0x4, scoped, tag = 'scoped memory for tpu_custom_call.1']
    #allocation6 [shape = 'u8[36864]{0}', space=vmem, size = 0x9000, scoped, tag = 'input window, operand 3, single buffered']
    %9 = vsyncpa [#allocation3], 0
    %s10 = scalar_lea.sflag [#allocation3], 1
    %11 = vsyncpa %s10, 0
    %12 = vsyncpa [#allocation5], 0
    loop: start=0, step=1, limit=4
    $region2: #{tpu_custom_call.1} parent=1 // loop_pre_header
      _
    $region3: #{tpu_custom_call.1} parent=1 // loop_header
      %s14 = sphi 0, %s18
      %p15 = scmp.ge.s32.totalorder %s14, 4
      %s24 = sphi 0, %s26
      %s27 = sphi 0, %s24
      %s28 = sphi 0, %s27
      %s44 = sphi 0, %s28
      %s48 = sphi 0, %s48
      %s50 = sphi 0, %s48
      %s51 = sphi 0, %s50
      %s65 = sphi 0, %s51
      %s69 = sphi 0, %s69
      %s71 = sphi 0, %s69
      %s72 = sphi 0, %s71
      %s86 = sphi 0, %s72
      %s90 = sphi 0, %s90
      %s92 = sphi 0, %s90
      %s93 = sphi 0, %s92
      %s107 = sphi 0, %s93
      %s113 = sphi 0, %s115
      %s116 = sphi 0, %s113
      %s117 = sphi 0, %s116
      %s133 = sphi 0, %s117
    $region4: #{tpu_custom_call.1} parent=1 // loop_header_branch
      %17 = sbr.rel (%p15) target = $region8
    $region5: #{tpu_custom_call.1} parent=1 // loop_body
      %s19 = ssub.s32 %s14, 1
      %s20 = ssub.s32 %s14, 2
      %s21 = sadd.s32 %s14, 1
      %s22 = ssub.s32 %s14, %s21
      %p23 = scmp.eq.s32.totalorder %s22, 0
      %s25 = sadd.s32 %s24, 1
      %s26 = scalar_select %p23, %s24, %s25
      %p29 = pneg %p23
      %p30 = scmp.eq.s32.totalorder %s14, 1
      %p31 = por %p29, %p30
      %p32 = scmp.ne.s32.totalorder %s24, %s27
      %p33 = scmp.eq.s32.totalorder %s14, 0
      %p34 = por %p32, %p33
      %p35 = scmp.ne.s32.totalorder %s24, %s27
      %p36 = scmp.eq.s32.totalorder %s19, 1
      %p37 = por %p35, %p36
      %p38 = scmp.ne.s32.totalorder %s27, %s28
      %p39 = scmp.eq.s32.totalorder %s19, 0
      %p40 = por %p38, %p39
      %p41 = scmp.ne.s32.totalorder %s27, %s28
      %p42 = scmp.eq.s32.totalorder %s20, 1
      %p43 = por %p41, %p42
      %p45 = scmp.ne.s32.totalorder %s28, %s44
      %p46 = scmp.eq.s32.totalorder %s20, 0
      %p47 = por %p45, %p46
      %s49 = sadd.s32 %s48, 1
      %p52 = scmp.eq.s32.totalorder %s14, 1
      %p53 = scmp.ne.s32.totalorder %s48, %s50
      %p54 = scmp.eq.s32.totalorder %s14, 0
      %p55 = por %p53, %p54
      %p56 = scmp.ne.s32.totalorder %s48, %s50
      %p57 = scmp.eq.s32.totalorder %s19, 1
      %p58 = por %p56, %p57
      %p59 = scmp.ne.s32.totalorder %s50, %s51
      %p60 = scmp.eq.s32.totalorder %s19, 0
      %p61 = por %p59, %p60
      %p62 = scmp.ne.s32.totalorder %s50, %s51
      %p63 = scmp.eq.s32.totalorder %s20, 1
      %p64 = por %p62, %p63
      %p66 = scmp.ne.s32.totalorder %s51, %s65
      %p67 = scmp.eq.s32.totalorder %s20, 0
      %p68 = por %p66, %p67
      %s70 = sadd.s32 %s69, 1
      %p73 = scmp.eq.s32.totalorder %s14, 1
      %p74 = scmp.ne.s32.totalorder %s69, %s71
      %p75 = scmp.eq.s32.totalorder %s14, 0
      %p76 = por %p74, %p75
      %p77 = scmp.ne.s32.totalorder %s69, %s71
      %p78 = scmp.eq.s32.totalorder %s19, 1
      %p79 = por %p77, %p78
      %p80 = scmp.ne.s32.totalorder %s71, %s72
      %p81 = scmp.eq.s32.totalorder %s19, 0
      %p82 = por %p80, %p81
      %p83 = scmp.ne.s32.totalorder %s71, %s72
      %p84 = scmp.eq.s32.totalorder %s20, 1
      %p85 = por %p83, %p84
      %p87 = scmp.ne.s32.totalorder %s72, %s86
      %p88 = scmp.eq.s32.totalorder %s20, 0
      %p89 = por %p87, %p88
      %s91 = sadd.s32 %s90, 1
      %p94 = scmp.eq.s32.totalorder %s14, 1
      %p95 = scmp.ne.s32.totalorder %s90, %s92
      %p96 = scmp.eq.s32.totalorder %s14, 0
      %p97 = por %p95, %p96
      %p98 = scmp.ne.s32.totalorder %s90, %s92
      %p99 = scmp.eq.s32.totalorder %s19, 1
      %p100 = por %p98, %p99
      %p101 = scmp.ne.s32.totalorder %s92, %s93
      %p102 = scmp.eq.s32.totalorder %s19, 0
      %p103 = por %p101, %p102
      %p104 = scmp.ne.s32.totalorder %s92, %s93
      %p105 = scmp.eq.s32.totalorder %s20, 1
      %p106 = por %p104, %p105
      %p108 = scmp.ne.s32.totalorder %s93, %s107
      %p109 = scmp.eq.s32.totalorder %s20, 0
      %p110 = por %p108, %p109
      %s111 = ssub.s32 %s14, %s21
      %p112 = scmp.eq.s32.totalorder %s111, 0
      %s114 = sadd.s32 %s113, 1
      %s115 = scalar_select %p112, %s113, %s114
      %p118 = pneg %p112
      %p119 = scmp.eq.s32.totalorder %s14, 1
      %p120 = por %p118, %p119
      %p121 = scmp.ne.s32.totalorder %s113, %s116
      %p122 = scmp.eq.s32.totalorder %s14, 0
      %p123 = por %p121, %p122
      %p124 = scmp.ne.s32.totalorder %s113, %s116
      %p125 = scmp.eq.s32.totalorder %s19, 1
      %p126 = por %p124, %p125
      %p127 = scmp.ne.s32.totalorder %s116, %s117
      %p128 = scmp.eq.s32.totalorder %s19, 0
      %p129 = por %p127, %p128
      %p130 = scmp.ne.s32.totalorder %s116, %s117
      %p131 = scmp.eq.s32.totalorder %s20, 1
      %p132 = por %p130, %p131
      %p134 = scmp.ne.s32.totalorder %s117, %s133
      %p135 = scmp.eq.s32.totalorder %s20, 0
      %p136 = por %p134, %p135
      %p137 = scmp.le.s32.totalorder 1, %s14
      %p138 = scmp.lt.s32.totalorder %s14, 3
      %p139 = pnand %p137, %p138
      %p140 = pneg %p139
      // Predicated region
      $region9: #{tpu_custom_call.1} parent=5 // pred_check
        _
      $region10: #{tpu_custom_call.1} parent=5 // pred_check_branch
        %142 = sbr.rel (%p139) target = $region12
      $region11: #{tpu_custom_call.1} parent=5 // pred_region
        %s143 = ssub.s32 %s14, 1
        // Predicated region
        $region13: #{tpu_custom_call.1} parent=11 // pred_check
          %p144 = pneg %p61
        $region14: #{tpu_custom_call.1} parent=11 // pred_check_branch
          %146 = sbr.rel (%p144) target = $region16
        $region15: #{tpu_custom_call.1} parent=11 // pred_region
          %s148 = ssub.s32 576, 576
          %149 = vsyncadd [#allocation5], %s148
          %s150 = sshll.u32 [#allocation4], 4
          %s151 = int_to_ptr.vmem [resolvable:$true] %s150
          %156 = dma.hbm_to_vmem [thread:$0]  %s1, 576, %s151, [#allocation5], 64, 64, 4
        $region16: #{tpu_custom_call.1} parent=11 // pred_fallthru
          _
        // Predicated region
        $region17: #{tpu_custom_call.1} parent=11 // pred_check
          %p157 = pneg %p82
        $region18: #{tpu_custom_call.1} parent=11 // pred_check_branch
          %159 = sbr.rel (%p157) target = $region20
        $region19: #{tpu_custom_call.1} parent=11 // pred_region
          _
        $region20: #{tpu_custom_call.1} parent=11 // pred_fallthru
          _
        // Predicated region
        $region21: #{tpu_custom_call.1} parent=11 // pred_check
          %p160 = pneg %p103
        $region22: #{tpu_custom_call.1} parent=11 // pred_check_branch
          %162 = sbr.rel (%p160) target = $region24
        $region23: #{tpu_custom_call.1} parent=11 // pred_region
          %s164 = ssub.s32 1152, 1152
          %165 = vsyncadd [#allocation5], %s164
          %s166 = sshll.u32 [#allocation6], 4
          %s167 = int_to_ptr.vmem [resolvable:$true] %s166
          %172 = dma.hbm_to_vmem [thread:$0]  %s3, 1152, %s167, [#allocation5], 128, 128, 8
        $region24: #{tpu_custom_call.1} parent=11 // pred_fallthru
          _
      $region12: #{tpu_custom_call.1} parent=5 // pred_fallthru
        _
      %p173 = scmp.lt.s32.totalorder %s14, 2
      // Predicated region
      $region25: #{tpu_custom_call.1} parent=5 // pred_check
        %p174 = pneg %p173
      $region26: #{tpu_custom_call.1} parent=5 // pred_check_branch
        %176 = sbr.rel (%p174) target = $region28
      $region27: #{tpu_custom_call.1} parent=5 // pred_region
        // Predicated region
        $region29: #{tpu_custom_call.1} parent=27 // pred_check
          %p177 = pneg %p34
        $region30: #{tpu_custom_call.1} parent=27 // pred_check_branch
          %179 = sbr.rel (%p177) target = $region32
        $region31: #{tpu_custom_call.1} parent=27 // pred_region
          %s180 = sand.u32 %s24, 1
          %s181 = scalar_lea.sflag [#allocation3], %s180
          %s182 = sand.u32 %s24, 1
          %s183 = smul.addr %s182, 128
          %s184 = scalar_lea.vmem [#allocation2], %s183
          %s186 = ssub.s32 2048, 2048
          %187 = vsyncadd %s181, %s186
          %s188 = smul.addr %s14, 16
          %s189 = smul.addr %s188, 128
          %s190 = scalar_lea.hbm %s0, %s189
          %s191 = sshll.u32 %s184, 4
          %s192 = int_to_ptr.vmem [resolvable:$true] %s191
          %197 = dma.hbm_to_vmem [thread:$0]  %s190, 2048, %s192, %s181, 256, 256, 16
        $region32: #{tpu_custom_call.1} parent=27 // pred_fallthru
          _
      $region28: #{tpu_custom_call.1} parent=5 // pred_fallthru
        _
      %p198 = scmp.le.s32.totalorder 1, %s14
      %p199 = scmp.lt.s32.totalorder %s14, 3
      %p200 = pnand %p198, %p199
      %p201 = pneg %p200
      // Predicated region
      $region33: #{tpu_custom_call.1} parent=5 // pred_check
        _
      $region34: #{tpu_custom_call.1} parent=5 // pred_check_branch
        %203 = sbr.rel (%p200) target = $region36
      $region35: #{tpu_custom_call.1} parent=5 // pred_region
        %s204 = ssub.s32 %s14, 1
        %s205 = sand.u32 %s27, 1
        %s206 = scalar_lea.sflag [#allocation3], %s205
        %s207 = sand.u32 %s27, 1
        %s208 = smul.addr %s207, 128
        %s209 = scalar_lea.vmem [#allocation2], %s208
        // Predicated region
        $region37: #{tpu_custom_call.1} parent=35 // pred_check
          %p210 = pneg %p40
        $region38: #{tpu_custom_call.1} parent=35 // pred_check_branch
          %212 = sbr.rel (%p210) target = $region40
        $region39: #{tpu_custom_call.1} parent=35 // pred_region
          %213 = dma.done %s206, 2048
        $region40: #{tpu_custom_call.1} parent=35 // pred_fallthru
          _
        // Predicated region
        $region41: #{tpu_custom_call.1} parent=35 // pred_check
          %p214 = pneg %p61
        $region42: #{tpu_custom_call.1} parent=35 // pred_check_branch
          %216 = sbr.rel (%p214) target = $region44
        $region43: #{tpu_custom_call.1} parent=35 // pred_region
          %217 = dma.done [#allocation5], 576
        $region44: #{tpu_custom_call.1} parent=35 // pred_fallthru
          _
        // Predicated region
        $region45: #{tpu_custom_call.1} parent=35 // pred_check
          %p218 = pneg %p103
        $region46: #{tpu_custom_call.1} parent=35 // pred_check_branch
          %220 = sbr.rel (%p218) target = $region48
        $region47: #{tpu_custom_call.1} parent=35 // pred_region
          %221 = dma.done [#allocation5], 1152
        $region48: #{tpu_custom_call.1} parent=35 // pred_fallthru
          _
        %s222 = sand.u32 %s27, 1
        %s223 = scalar_lea.sflag [#allocation3], %s222
        %s224 = sand.u32 %s27, 1
        %s225 = smul.addr %s224, 128
        %s226 = scalar_lea.vmem [#allocation2], %s225
        %p227 = pneg %p40
        %p228 = pneg %p37
        %p229 = pneg %p61
        %p230 = pneg %p58
        %p231 = pneg %p82
        %p232 = pneg %p79
        %p233 = pneg %p103
        %p234 = pneg %p100
        %p235 = pneg %p129
        %p236 = pneg %p126
        %p237 = scmp.lt.s32.totalorder %s19, 1
        %s238 = scalar_select %p237, %s19, 1
        %s239 = smul.addr %s238, 2
        %s240 = smul.addr %s239, 4
        %s241 = scalar_lea.vmem %s4, %s240
        %p242 = scmp.lt.s32.totalorder %s19, 1
        %s243 = scalar_select %p242, %s19, 1
        %s244 = smul.addr %s243, 2
        %s245 = smul.addr %s244, 4
        %s246 = scalar_lea.vmem %s4, %s245
        %v247 = vld [vmem:[%s209] sm:$0xff]
        %v248 = vld [vmem:[%s209 + $0x8] sm:$0xff]
        %v249 = vld [vmem:[%s209 + $0x10] sm:$0xff]
        %v250 = vld [vmem:[%s209 + $0x18] sm:$0xff]
        %v251 = vld [vmem:[%s209 + $0x20] sm:$0xff]
        %v252 = vld [vmem:[%s209 + $0x28] sm:$0xff]
        %v253 = vld [vmem:[%s209 + $0x30] sm:$0xff]
        %v254 = vld [vmem:[%s209 + $0x38] sm:$0xff]
        %v255 = vld [vmem:[%s209 + $0x40] sm:$0xff]
        %v256 = vld [vmem:[%s209 + $0x48] sm:$0xff]
        %v257 = vld [vmem:[%s209 + $0x50] sm:$0xff]
        %v258 = vld [vmem:[%s209 + $0x58] sm:$0xff]
        %v259 = vld [vmem:[%s209 + $0x60] sm:$0xff]
        %v260 = vld [vmem:[%s209 + $0x68] sm:$0xff]
        %v261 = vld [vmem:[%s209 + $0x70] sm:$0xff]
        %v262 = vld [vmem:[%s209 + $0x78] sm:$0xff]
        %v263 = vld [vmem:[#allocation4] sm:$0x7]
        %vm264 = vcmask 523264
        %v266 = vsel %vm264, %v263, 0
        %268 = vmatprep.subr.mxu0 %v248
        %269 = vmatpush1.msra.mxu0 %v247
        %270 = vmatprep.subr.mxu0 %v250
        %271 = vmatpush1.msra.mxu0 %v249
        %272 = vmatprep.subr.mxu0 %v252
        %273 = vmatpush1.msra.mxu0 %v251
        %274 = vmatprep.subr.mxu0 %v254
        %275 = vmatpush1.msra.mxu0 %v253
        %276 = vmatprep.subr.mxu0 %v256
        %277 = vmatpush1.msra.mxu0 %v255
        %278 = vmatprep.subr.mxu0 %v258
        %279 = vmatpush1.msra.mxu0 %v257
        %280 = vmatprep.subr.mxu0 %v260
        %281 = vmatpush1.msra.mxu0 %v259
        %282 = vmatprep.subr.mxu0 %v262
        %283 = vmatpush1.msra.mxu0 %v261
        %284 = vmatprep.subr.mxu0 0.0
        %285 = vmatpush1.msra.mxu0 0.0
        %286 = vmatprep.subr.mxu0 0.0
        %287 = vmatpush1.msra.mxu0 0.0
        %288 = vmatprep.subr.mxu0 0.0
        %289 = vmatpush1.msra.mxu0 0.0
        %290 = vmatprep.subr.mxu0 0.0
        %291 = vmatpush1.msra.mxu0 0.0
        %292 = vmatprep.subr.mxu0 0.0
        %293 = vmatpush1.msra.mxu0 0.0
        %294 = vmatprep.subr.mxu0 0.0
        %295 = vmatpush1.msra.mxu0 0.0
        %296 = vmatprep.subr.mxu0 0.0
        %297 = vmatpush1.msra.mxu0 0.0
        %298 = vmatprep.subr.mxu0 0.0
        %299 = vmatpush1.msra.mxu0 0.0
        %300 = vmatprep.subr.mxu0 0.0
        %301 = vmatpush1.msra.mxu0 0.0
        %302 = vmatprep.subr.mxu0 0.0
        %303 = vmatpush1.msra.mxu0 0.0
        %304 = vmatprep.subr.mxu0 0.0
        %305 = vmatpush1.msra.mxu0 0.0
        %306 = vmatprep.subr.mxu0 0.0
        %307 = vmatpush1.msra.mxu0 0.0
        %308 = vmatprep.subr.mxu0 0.0
        %309 = vmatpush1.msra.mxu0 0.0
        %310 = vmatprep.subr.mxu0 0.0
        %311 = vmatpush1.msra.mxu0 0.0
        %312 = vmatprep.subr.mxu0 0.0
        %313 = vmatpush1.msra.mxu0 0.0
        %314 = vmatprep.subr.mxu0 0.0
        %315 = vmatpush1.msra.mxu0 0.0
        %316 = vmatprep.subr.mxu0 0.0
        %317 = vmatpush1.msra.mxu0 0.0
        %318 = vmatprep.subr.mxu0 0.0
        %319 = vmatpush1.msra.mxu0 0.0
        %320 = vmatprep.subr.mxu0 0.0
        %321 = vmatpush1.msra.mxu0 0.0
        %322 = vmatprep.subr.mxu0 0.0
        %323 = vmatpush1.msra.mxu0 0.0
        %324 = vmatprep.subr.mxu0 0.0
        %325 = vmatpush1.msra.mxu0 0.0
        %326 = vmatprep.subr.mxu0 0.0
        %327 = vmatpush1.msra.mxu0 0.0
        %328 = vmatprep.subr.mxu0 0.0
        %329 = vmatpush1.msra.mxu0 0.0
        %330 = vmatprep.subr.mxu0 0.0
        %331 = vmatpush1.msra.mxu0 0.0
        %332 = vmatprep.mubr.f32.mxu0 0.0
        %333 = vmatmul.mubr.f32.gmra.mrb[0].mxu0 %v266
        %v334 = vpop.f32.mrb[0].mxu0
        %v335 = vadd.f32 0.0, %v334
        %v336 = vpop.f32.mrb[0].mxu0
        %v337 = vadd.f32 0.0, %v336
        %338 = vdwg.mxu0
        %340 = vrot.lane.b32.xlu0 %v337, 17
        %v341 = vpop.permute.xlu0 %340
        %344 = vrot.lane.b32.xlu0 %v335, 17
        %v345 = vpop.permute.xlu0 %344
        %vm346 = vcmask 138240
        %v347 = vsel %vm346, %v345, %v341
        %v350 = vsel %vm346, %v341, %v345
        %v351 = vld [vmem:[#allocation6] sm:$0x77]
        %v353 = vcombine.high %v351, %v351
        %v355 = vmul.f32 %v350, %v351
        %v356 = vmul.f32 %v347, %v353
        %v357 = vadd.f32 %v355, 0.0
        %v358 = vadd.f32 %v356, 0.0
        %s359 = scalar_lea.vmem [#allocation4], 4
        %v360 = vld [vmem:[%s359] sm:$0x7]
        %v362 = vsel %vm264, %v360, 0
        %364 = vmatprep.subr.mxu0 %v248
        %365 = vmatpush1.msra.mxu0 %v247
        %366 = vmatprep.subr.mxu0 %v250
        %367 = vmatpush1.msra.mxu0 %v249
        %368 = vmatprep.subr.mxu0 %v252
        %369 = vmatpush1.msra.mxu0 %v251
        %370 = vmatprep.subr.mxu0 %v254
        %371 = vmatpush1.msra.mxu0 %v253
        %372 = vmatprep.subr.mxu0 %v256
        %373 = vmatpush1.msra.mxu0 %v255
        %374 = vmatprep.subr.mxu0 %v258
        %375 = vmatpush1.msra.mxu0 %v257
        %376 = vmatprep.subr.mxu0 %v260
        %377 = vmatpush1.msra.mxu0 %v259
        %378 = vmatprep.subr.mxu0 %v262
        %379 = vmatpush1.msra.mxu0 %v261
        %380 = vmatprep.subr.mxu0 0.0
        %381 = vmatpush1.msra.mxu0 0.0
        %382 = vmatprep.subr.mxu0 0.0
        %383 = vmatpush1.msra.mxu0 0.0
        %384 = vmatprep.subr.mxu0 0.0
        %385 = vmatpush1.msra.mxu0 0.0
        %386 = vmatprep.subr.mxu0 0.0
        %387 = vmatpush1.msra.mxu0 0.0
        %388 = vmatprep.subr.mxu0 0.0
        %389 = vmatpush1.msra.mxu0 0.0
        %390 = vmatprep.subr.mxu0 0.0
        %391 = vmatpush1.msra.mxu0 0.0
        %392 = vmatprep.subr.mxu0 0.0
        %393 = vmatpush1.msra.mxu0 0.0
        %394 = vmatprep.subr.mxu0 0.0
        %395 = vmatpush1.msra.mxu0 0.0
        %396 = vmatprep.subr.mxu0 0.0
        %397 = vmatpush1.msra.mxu0 0.0
        %398 = vmatprep.subr.mxu0 0.0
        %399 = vmatpush1.msra.mxu0 0.0
        %400 = vmatprep.subr.mxu0 0.0
        %401 = vmatpush1.msra.mxu0 0.0
        %402 = vmatprep.subr.mxu0 0.0
        %403 = vmatpush1.msra.mxu0 0.0
        %404 = vmatprep.subr.mxu0 0.0
        %405 = vmatpush1.msra.mxu0 0.0
        %406 = vmatprep.subr.mxu0 0.0
        %407 = vmatpush1.msra.mxu0 0.0
        %408 = vmatprep.subr.mxu0 0.0
        %409 = vmatpush1.msra.mxu0 0.0
        %410 = vmatprep.subr.mxu0 0.0
        %411 = vmatpush1.msra.mxu0 0.0
        %412 = vmatprep.subr.mxu0 0.0
        %413 = vmatpush1.msra.mxu0 0.0
        %414 = vmatprep.subr.mxu0 0.0
        %415 = vmatpush1.msra.mxu0 0.0
        %416 = vmatprep.subr.mxu0 0.0
        %417 = vmatpush1.msra.mxu0 0.0
        %418 = vmatprep.subr.mxu0 0.0
        %419 = vmatpush1.msra.mxu0 0.0
        %420 = vmatprep.subr.mxu0 0.0
        %421 = vmatpush1.msra.mxu0 0.0
        %422 = vmatprep.subr.mxu0 0.0
        %423 = vmatpush1.msra.mxu0 0.0
        %424 = vmatprep.subr.mxu0 0.0
        %425 = vmatpush1.msra.mxu0 0.0
        %426 = vmatprep.subr.mxu0 0.0
        %427 = vmatpush1.msra.mxu0 0.0
        %428 = vmatprep.mubr.f32.mxu0 0.0
        %429 = vmatmul.mubr.f32.gmra.mrb[0].mxu0 %v362
        %v430 = vpop.f32.mrb[0].mxu0
        %v431 = vadd.f32 0.0, %v430
        %v432 = vpop.f32.mrb[0].mxu0
        %v433 = vadd.f32 0.0, %v432
        %434 = vdwg.mxu0
        %436 = vrot.lane.b32.xlu0 %v433, 16
        %v437 = vpop.permute.xlu0 %436
        %440 = vrot.lane.b32.xlu0 %v431, 16
        %v441 = vpop.permute.xlu0 %440
        %vm442 = vcmask 130048
        %v443 = vsel %vm442, %v441, %v437
        %v446 = vsel %vm442, %v437, %v441
        %s447 = scalar_lea.vmem [#allocation6], 8
        %v448 = vld [vmem:[%s447] sm:$0x77]
        %v450 = vcombine.high %v448, %v448
        %v452 = vmul.f32 %v446, %v448
        %v453 = vmul.f32 %v443, %v450
        %v454 = vadd.f32 %v357, %v452
        %v455 = vadd.f32 %v358, %v453
        %s456 = scalar_lea.vmem [#allocation4], 8
        %v457 = vld [vmem:[%s456] sm:$0x7]
        %v459 = vsel %vm264, %v457, 0
        %461 = vmatprep.subr.mxu0 %v248
        %462 = vmatpush1.msra.mxu0 %v247
        %463 = vmatprep.subr.mxu0 %v250
        %464 = vmatpush1.msra.mxu0 %v249
        %465 = vmatprep.subr.mxu0 %v252
        %466 = vmatpush1.msra.mxu0 %v251
        %467 = vmatprep.subr.mxu0 %v254
        %468 = vmatpush1.msra.mxu0 %v253
        %469 = vmatprep.subr.mxu0 %v256
        %470 = vmatpush1.msra.mxu0 %v255
        %471 = vmatprep.subr.mxu0 %v258
        %472 = vmatpush1.msra.mxu0 %v257
        %473 = vmatprep.subr.mxu0 %v260
        %474 = vmatpush1.msra.mxu0 %v259
        %475 = vmatprep.subr.mxu0 %v262
        %476 = vmatpush1.msra.mxu0 %v261
        %477 = vmatprep.subr.mxu0 0.0
        %478 = vmatpush1.msra.mxu0 0.0
        %479 = vmatprep.subr.mxu0 0.0
        %480 = vmatpush1.msra.mxu0 0.0
        %481 = vmatprep.subr.mxu0 0.0
        %482 = vmatpush1.msra.mxu0 0.0
        %483 = vmatprep.subr.mxu0 0.0
        %484 = vmatpush1.msra.mxu0 0.0
        %485 = vmatprep.subr.mxu0 0.0
        %486 = vmatpush1.msra.mxu0 0.0
        %487 = vmatprep.subr.mxu0 0.0
        %488 = vmatpush1.msra.mxu0 0.0
        %489 = vmatprep.subr.mxu0 0.0
        %490 = vmatpush1.msra.mxu0 0.0
        %491 = vmatprep.subr.mxu0 0.0
        %492 = vmatpush1.msra.mxu0 0.0
        %493 = vmatprep.subr.mxu0 0.0
        %494 = vmatpush1.msra.mxu0 0.0
        %495 = vmatprep.subr.mxu0 0.0
        %496 = vmatpush1.msra.mxu0 0.0
        %497 = vmatprep.subr.mxu0 0.0
        %498 = vmatpush1.msra.mxu0 0.0
        %499 = vmatprep.subr.mxu0 0.0
        %500 = vmatpush1.msra.mxu0 0.0
        %501 = vmatprep.subr.mxu0 0.0
        %502 = vmatpush1.msra.mxu0 0.0
        %503 = vmatprep.subr.mxu0 0.0
        %504 = vmatpush1.msra.mxu0 0.0
        %505 = vmatprep.subr.mxu0 0.0
        %506 = vmatpush1.msra.mxu0 0.0
        %507 = vmatprep.subr.mxu0 0.0
        %508 = vmatpush1.msra.mxu0 0.0
        %509 = vmatprep.subr.mxu0 0.0
        %510 = vmatpush1.msra.mxu0 0.0
        %511 = vmatprep.subr.mxu0 0.0
        %512 = vmatpush1.msra.mxu0 0.0
        %513 = vmatprep.subr.mxu0 0.0
        %514 = vmatpush1.msra.mxu0 0.0
        %515 = vmatprep.subr.mxu0 0.0
        %516 = vmatpush1.msra.mxu0 0.0
        %517 = vmatprep.subr.mxu0 0.0
        %518 = vmatpush1.msra.mxu0 0.0
        %519 = vmatprep.subr.mxu0 0.0
        %520 = vmatpush1.msra.mxu0 0.0
        %521 = vmatprep.subr.mxu0 0.0
        %522 = vmatpush1.msra.mxu0 0.0
        %523 = vmatprep.subr.mxu0 0.0
        %524 = vmatpush1.msra.mxu0 0.0
        %525 = vmatprep.mubr.f32.mxu0 0.0
        %526 = vmatmul.mubr.f32.gmra.mrb[0].mxu0 %v459
        %v527 = vpop.f32.mrb[0].mxu0
        %v528 = vadd.f32 0.0, %v527
        %v529 = vpop.f32.mrb[0].mxu0
        %v530 = vadd.f32 0.0, %v529
        %531 = vdwg.mxu0
        %533 = vrot.lane.b32.xlu0 %v530, 15
        %v534 = vpop.permute.xlu0 %533
        %537 = vrot.lane.b32.xlu0 %v528, 15
        %v538 = vpop.permute.xlu0 %537
        %vm539 = vcmask 121856
        %v540 = vsel %vm539, %v538, %v534
        %v543 = vsel %vm539, %v534, %v538
        %s544 = scalar_lea.vmem [#allocation6], 16
        %v545 = vld [vmem:[%s544] sm:$0x77]
        %v547 = vcombine.high %v545, %v545
        %v549 = vmul.f32 %v543, %v545
        %v550 = vmul.f32 %v540, %v547
        %v551 = vadd.f32 %v454, %v549
        %v552 = vadd.f32 %v455, %v550
        %s553 = scalar_lea.vmem [#allocation4], 12
        %v554 = vld [vmem:[%s553] sm:$0x7]
        %v556 = vsel %vm264, %v554, 0
        %558 = vmatprep.subr.mxu0 %v248
        %559 = vmatpush1.msra.mxu0 %v247
        %560 = vmatprep.subr.mxu0 %v250
        %561 = vmatpush1.msra.mxu0 %v249
        %562 = vmatprep.subr.mxu0 %v252
        %563 = vmatpush1.msra.mxu0 %v251
        %564 = vmatprep.subr.mxu0 %v254
        %565 = vmatpush1.msra.mxu0 %v253
        %566 = vmatprep.subr.mxu0 %v256
        %567 = vmatpush1.msra.mxu0 %v255
        %568 = vmatprep.subr.mxu0 %v258
        %569 = vmatpush1.msra.mxu0 %v257
        %570 = vmatprep.subr.mxu0 %v260
        %571 = vmatpush1.msra.mxu0 %v259
        %572 = vmatprep.subr.mxu0 %v262
        %573 = vmatpush1.msra.mxu0 %v261
        %574 = vmatprep.subr.mxu0 0.0
        %575 = vmatpush1.msra.mxu0 0.0
        %576 = vmatprep.subr.mxu0 0.0
        %577 = vmatpush1.msra.mxu0 0.0
        %578 = vmatprep.subr.mxu0 0.0
        %579 = vmatpush1.msra.mxu0 0.0
        %580 = vmatprep.subr.mxu0 0.0
        %581 = vmatpush1.msra.mxu0 0.0
        %582 = vmatprep.subr.mxu0 0.0
        %583 = vmatpush1.msra.mxu0 0.0
        %584 = vmatprep.subr.mxu0 0.0
        %585 = vmatpush1.msra.mxu0 0.0
        %586 = vmatprep.subr.mxu0 0.0
        %587 = vmatpush1.msra.mxu0 0.0
        %588 = vmatprep.subr.mxu0 0.0
        %589 = vmatpush1.msra.mxu0 0.0
        %590 = vmatprep.subr.mxu0 0.0
        %591 = vmatpush1.msra.mxu0 0.0
        %592 = vmatprep.subr.mxu0 0.0
        %593 = vmatpush1.msra.mxu0 0.0
        %594 = vmatprep.subr.mxu0 0.0
        %595 = vmatpush1.msra.mxu0 0.0
        %596 = vmatprep.subr.mxu0 0.0
        %597 = vmatpush1.msra.mxu0 0.0
        %598 = vmatprep.subr.mxu0 0.0
        %599 = vmatpush1.msra.mxu0 0.0
        %600 = vmatprep.subr.mxu0 0.0
        %601 = vmatpush1.msra.mxu0 0.0
        %602 = vmatprep.subr.mxu0 0.0
        %603 = vmatpush1.msra.mxu0 0.0
        %604 = vmatprep.subr.mxu0 0.0
        %605 = vmatpush1.msra.mxu0 0.0
        %606 = vmatprep.subr.mxu0 0.0
        %607 = vmatpush1.msra.mxu0 0.0
        %608 = vmatprep.subr.mxu0 0.0
        %609 = vmatpush1.msra.mxu0 0.0
        %610 = vmatprep.subr.mxu0 0.0
        %611 = vmatpush1.msra.mxu0 0.0
        %612 = vmatprep.subr.mxu0 0.0
        %613 = vmatpush1.msra.mxu0 0.0
        %614 = vmatprep.subr.mxu0 0.0
        %615 = vmatpush1.msra.mxu0 0.0
        %616 = vmatprep.subr.mxu0 0.0
        %617 = vmatpush1.msra.mxu0 0.0
        %618 = vmatprep.subr.mxu0 0.0
        %619 = vmatpush1.msra.mxu0 0.0
        %620 = vmatprep.subr.mxu0 0.0
        %621 = vmatpush1.msra.mxu0 0.0
        %622 = vmatprep.mubr.f32.mxu0 0.0
        %623 = vmatmul.mubr.f32.gmra.mrb[0].mxu0 %v556
        %v624 = vpop.f32.mrb[0].mxu0
        %v625 = vadd.f32 0.0, %v624
        %v626 = vpop.f32.mrb[0].mxu0
        %v627 = vadd.f32 0.0, %v626
        %628 = vdwg.mxu0
        %630 = vrot.lane.b32.xlu0 %v627, 1
        %v631 = vpop.permute.xlu0 %630
        %634 = vrot.lane.b32.xlu0 %v625, 1
        %v635 = vpop.permute.xlu0 %634
        %vm636 = vcmask 7168
        %v637 = vsel %vm636, %v635, %v631
        %v640 = vsel %vm636, %v631, %v635
        %s641 = scalar_lea.vmem [#allocation6], 24
        %v642 = vld [vmem:[%s641] sm:$0x77]
        %v644 = vcombine.high %v642, %v642
        %v646 = vmul.f32 %v640, %v642
        %v647 = vmul.f32 %v637, %v644
        %v648 = vadd.f32 %v551, %v646
        %v649 = vadd.f32 %v552, %v647
        %s650 = scalar_lea.vmem [#allocation4], 16
        %v651 = vld [vmem:[%s650] sm:$0x7]
        %v653 = vsel %vm264, %v651, 0
        %655 = vmatprep.subr.mxu0 %v248
        %656 = vmatpush1.msra.mxu0 %v247
        %657 = vmatprep.subr.mxu0 %v250
        %658 = vmatpush1.msra.mxu0 %v249
        %659 = vmatprep.subr.mxu0 %v252
        %660 = vmatpush1.msra.mxu0 %v251
        %661 = vmatprep.subr.mxu0 %v254
        %662 = vmatpush1.msra.mxu0 %v253
        %663 = vmatprep.subr.mxu0 %v256
        %664 = vmatpush1.msra.mxu0 %v255
        %665 = vmatprep.subr.mxu0 %v258
        %666 = vmatpush1.msra.mxu0 %v257
        %667 = vmatprep.subr.mxu0 %v260
        %668 = vmatpush1.msra.mxu0 %v259
        %669 = vmatprep.subr.mxu0 %v262
        %670 = vmatpush1.msra.mxu0 %v261
        %671 = vmatprep.subr.mxu0 0.0
        %672 = vmatpush1.msra.mxu0 0.0
        %673 = vmatprep.subr.mxu0 0.0
        %674 = vmatpush1.msra.mxu0 0.0
        %675 = vmatprep.subr.mxu0 0.0
        %676 = vmatpush1.msra.mxu0 0.0
        %677 = vmatprep.subr.mxu0 0.0
        %678 = vmatpush1.msra.mxu0 0.0
        %679 = vmatprep.subr.mxu0 0.0
        %680 = vmatpush1.msra.mxu0 0.0
        %681 = vmatprep.subr.mxu0 0.0
        %682 = vmatpush1.msra.mxu0 0.0
        %683 = vmatprep.subr.mxu0 0.0
        %684 = vmatpush1.msra.mxu0 0.0
        %685 = vmatprep.subr.mxu0 0.0
        %686 = vmatpush1.msra.mxu0 0.0
        %687 = vmatprep.subr.mxu0 0.0
        %688 = vmatpush1.msra.mxu0 0.0
        %689 = vmatprep.subr.mxu0 0.0
        %690 = vmatpush1.msra.mxu0 0.0
        %691 = vmatprep.subr.mxu0 0.0
        %692 = vmatpush1.msra.mxu0 0.0
        %693 = vmatprep.subr.mxu0 0.0
        %694 = vmatpush1.msra.mxu0 0.0
        %695 = vmatprep.subr.mxu0 0.0
        %696 = vmatpush1.msra.mxu0 0.0
        %697 = vmatprep.subr.mxu0 0.0
        %698 = vmatpush1.msra.mxu0 0.0
        %699 = vmatprep.subr.mxu0 0.0
        %700 = vmatpush1.msra.mxu0 0.0
        %701 = vmatprep.subr.mxu0 0.0
        %702 = vmatpush1.msra.mxu0 0.0
        %703 = vmatprep.subr.mxu0 0.0
        %704 = vmatpush1.msra.mxu0 0.0
        %705 = vmatprep.subr.mxu0 0.0
        %706 = vmatpush1.msra.mxu0 0.0
        %707 = vmatprep.subr.mxu0 0.0
        %708 = vmatpush1.msra.mxu0 0.0
        %709 = vmatprep.subr.mxu0 0.0
        %710 = vmatpush1.msra.mxu0 0.0
        %711 = vmatprep.subr.mxu0 0.0
        %712 = vmatpush1.msra.mxu0 0.0
        %713 = vmatprep.subr.mxu0 0.0
        %714 = vmatpush1.msra.mxu0 0.0
        %715 = vmatprep.subr.mxu0 0.0
        %716 = vmatpush1.msra.mxu0 0.0
        %717 = vmatprep.subr.mxu0 0.0
        %718 = vmatpush1.msra.mxu0 0.0
        %719 = vmatprep.mubr.f32.mxu0 0.0
        %720 = vmatmul.mubr.f32.gmra.mrb[0].mxu0 %v653
        %v721 = vpop.f32.mrb[0].mxu0
        %v722 = vadd.f32 0.0, %v721
        %v723 = vpop.f32.mrb[0].mxu0
        %v724 = vadd.f32 0.0, %v723
        %725 = vdwg.mxu0
        %v726 = vadd.f32 %v648, %v722
        %v727 = vadd.f32 %v649, %v724
        %s728 = scalar_lea.vmem [#allocation4], 20
        %v729 = vld [vmem:[%s728] sm:$0x7]
        %v731 = vsel %vm264, %v729, 0
        %733 = vmatprep.subr.mxu0 %v248
        %734 = vmatpush1.msra.mxu0 %v247
        %735 = vmatprep.subr.mxu0 %v250
        %736 = vmatpush1.msra.mxu0 %v249
        %737 = vmatprep.subr.mxu0 %v252
        %738 = vmatpush1.msra.mxu0 %v251
        %739 = vmatprep.subr.mxu0 %v254
        %740 = vmatpush1.msra.mxu0 %v253
        %741 = vmatprep.subr.mxu0 %v256
        %742 = vmatpush1.msra.mxu0 %v255
        %743 = vmatprep.subr.mxu0 %v258
        %744 = vmatpush1.msra.mxu0 %v257
        %745 = vmatprep.subr.mxu0 %v260
        %746 = vmatpush1.msra.mxu0 %v259
        %747 = vmatprep.subr.mxu0 %v262
        %748 = vmatpush1.msra.mxu0 %v261
        %749 = vmatprep.subr.mxu0 0.0
        %750 = vmatpush1.msra.mxu0 0.0
        %751 = vmatprep.subr.mxu0 0.0
        %752 = vmatpush1.msra.mxu0 0.0
        %753 = vmatprep.subr.mxu0 0.0
        %754 = vmatpush1.msra.mxu0 0.0
        %755 = vmatprep.subr.mxu0 0.0
        %756 = vmatpush1.msra.mxu0 0.0
        %757 = vmatprep.subr.mxu0 0.0
        %758 = vmatpush1.msra.mxu0 0.0
        %759 = vmatprep.subr.mxu0 0.0
        %760 = vmatpush1.msra.mxu0 0.0
        %761 = vmatprep.subr.mxu0 0.0
        %762 = vmatpush1.msra.mxu0 0.0
        %763 = vmatprep.subr.mxu0 0.0
        %764 = vmatpush1.msra.mxu0 0.0
        %765 = vmatprep.subr.mxu0 0.0
        %766 = vmatpush1.msra.mxu0 0.0
        %767 = vmatprep.subr.mxu0 0.0
        %768 = vmatpush1.msra.mxu0 0.0
        %769 = vmatprep.subr.mxu0 0.0
        %770 = vmatpush1.msra.mxu0 0.0
        %771 = vmatprep.subr.mxu0 0.0
        %772 = vmatpush1.msra.mxu0 0.0
        %773 = vmatprep.subr.mxu0 0.0
        %774 = vmatpush1.msra.mxu0 0.0
        %775 = vmatprep.subr.mxu0 0.0
        %776 = vmatpush1.msra.mxu0 0.0
        %777 = vmatprep.subr.mxu0 0.0
        %778 = vmatpush1.msra.mxu0 0.0
        %779 = vmatprep.subr.mxu0 0.0
        %780 = vmatpush1.msra.mxu0 0.0
        %781 = vmatprep.subr.mxu0 0.0
        %782 = vmatpush1.msra.mxu0 0.0
        %783 = vmatprep.subr.mxu0 0.0
        %784 = vmatpush1.msra.mxu0 0.0
        %785 = vmatprep.subr.mxu0 0.0
        %786 = vmatpush1.msra.mxu0 0.0
        %787 = vmatprep.subr.mxu0 0.0
        %788 = vmatpush1.msra.mxu0 0.0
        %789 = vmatprep.subr.mxu0 0.0
        %790 = vmatpush1.msra.mxu0 0.0
        %791 = vmatprep.subr.mxu0 0.0
        %792 = vmatpush1.msra.mxu0 0.0
        %793 = vmatprep.subr.mxu0 0.0
        %794 = vmatpush1.msra.mxu0 0.0
        %795 = vmatprep.subr.mxu0 0.0
        %796 = vmatpush1.msra.mxu0 0.0
        %797 = vmatprep.mubr.f32.mxu0 0.0
        %798 = vmatmul.mubr.f32.gmra.mrb[0].mxu0 %v731
        %v799 = vpop.f32.mrb[0].mxu0
        %v800 = vadd.f32 0.0, %v799
        %v801 = vpop.f32.mrb[0].mxu0
        %v802 = vadd.f32 0.0, %v801
        %803 = vdwg.mxu0
        %806 = vrot.lane.b32.xlu0 %v800, 127
        %v807 = vpop.permute.xlu0 %806
        %808 = vrot.lane.b32.xlu0 %v802, 127
        %v809 = vpop.permute.xlu0 %808
        %vm810 = vcmask 1039360
        %v811 = vsel %vm810, %v807, %v809
        %v815 = vsel %vm810, %v809, %v807
        %s816 = scalar_lea.vmem [#allocation6], 40
        %v817 = vld [vmem:[%s816] sm:$0x77]
        %v819 = vcombine.high %v817, %v817
        %v821 = vmul.f32 %v811, %v817
        %v822 = vmul.f32 %v815, %v819
        %v823 = vadd.f32 %v726, %v821
        %v824 = vadd.f32 %v727, %v822
        %s825 = scalar_lea.vmem [#allocation4], 24
        %v826 = vld [vmem:[%s825] sm:$0x7]
        %v828 = vsel %vm264, %v826, 0
        %830 = vmatprep.subr.mxu0 %v248
        %831 = vmatpush1.msra.mxu0 %v247
        %832 = vmatprep.subr.mxu0 %v250
        %833 = vmatpush1.msra.mxu0 %v249
        %834 = vmatprep.subr.mxu0 %v252
        %835 = vmatpush1.msra.mxu0 %v251
        %836 = vmatprep.subr.mxu0 %v254
        %837 = vmatpush1.msra.mxu0 %v253
        %838 = vmatprep.subr.mxu0 %v256
        %839 = vmatpush1.msra.mxu0 %v255
        %840 = vmatprep.subr.mxu0 %v258
        %841 = vmatpush1.msra.mxu0 %v257
        %842 = vmatprep.subr.mxu0 %v260
        %843 = vmatpush1.msra.mxu0 %v259
        %844 = vmatprep.subr.mxu0 %v262
        %845 = vmatpush1.msra.mxu0 %v261
        %846 = vmatprep.subr.mxu0 0.0
        %847 = vmatpush1.msra.mxu0 0.0
        %848 = vmatprep.subr.mxu0 0.0
        %849 = vmatpush1.msra.mxu0 0.0
        %850 = vmatprep.subr.mxu0 0.0
        %851 = vmatpush1.msra.mxu0 0.0
        %852 = vmatprep.subr.mxu0 0.0
        %853 = vmatpush1.msra.mxu0 0.0
        %854 = vmatprep.subr.mxu0 0.0
        %855 = vmatpush1.msra.mxu0 0.0
        %856 = vmatprep.subr.mxu0 0.0
        %857 = vmatpush1.msra.mxu0 0.0
        %858 = vmatprep.subr.mxu0 0.0
        %859 = vmatpush1.msra.mxu0 0.0
        %860 = vmatprep.subr.mxu0 0.0
        %861 = vmatpush1.msra.mxu0 0.0
        %862 = vmatprep.subr.mxu0 0.0
        %863 = vmatpush1.msra.mxu0 0.0
        %864 = vmatprep.subr.mxu0 0.0
        %865 = vmatpush1.msra.mxu0 0.0
        %866 = vmatprep.subr.mxu0 0.0
        %867 = vmatpush1.msra.mxu0 0.0
        %868 = vmatprep.subr.mxu0 0.0
        %869 = vmatpush1.msra.mxu0 0.0
        %870 = vmatprep.subr.mxu0 0.0
        %871 = vmatpush1.msra.mxu0 0.0
        %872 = vmatprep.subr.mxu0 0.0
        %873 = vmatpush1.msra.mxu0 0.0
        %874 = vmatprep.subr.mxu0 0.0
        %875 = vmatpush1.msra.mxu0 0.0
        %876 = vmatprep.subr.mxu0 0.0
        %877 = vmatpush1.msra.mxu0 0.0
        %878 = vmatprep.subr.mxu0 0.0
        %879 = vmatpush1.msra.mxu0 0.0
        %880 = vmatprep.subr.mxu0 0.0
        %881 = vmatpush1.msra.mxu0 0.0
        %882 = vmatprep.subr.mxu0 0.0
        %883 = vmatpush1.msra.mxu0 0.0
        %884 = vmatprep.subr.mxu0 0.0
        %885 = vmatpush1.msra.mxu0 0.0
        %886 = vmatprep.subr.mxu0 0.0
        %887 = vmatpush1.msra.mxu0 0.0
        %888 = vmatprep.subr.mxu0 0.0
        %889 = vmatpush1.msra.mxu0 0.0
        %890 = vmatprep.subr.mxu0 0.0
        %891 = vmatpush1.msra.mxu0 0.0
        %892 = vmatprep.subr.mxu0 0.0
        %893 = vmatpush1.msra.mxu0 0.0
        %894 = vmatprep.mubr.f32.mxu0 0.0
        %895 = vmatmul.mubr.f32.gmra.mrb[0].mxu0 %v828
        %v896 = vpop.f32.mrb[0].mxu0
        %v897 = vadd.f32 0.0, %v896
        %v898 = vpop.f32.mrb[0].mxu0
        %v899 = vadd.f32 0.0, %v898
        %900 = vdwg.mxu0
        %903 = vrot.lane.b32.xlu0 %v897, 113
        %v904 = vpop.permute.xlu0 %903
        %905 = vrot.lane.b32.xlu0 %v899, 113
        %v906 = vpop.permute.xlu0 %905
        %vm907 = vcmask 924672
        %v908 = vsel %vm907, %v904, %v906
        %v912 = vsel %vm907, %v906, %v904
        %s913 = scalar_lea.vmem [#allocation6], 48
        %v914 = vld [vmem:[%s913] sm:$0x77]
        %v916 = vcombine.high %v914, %v914
        %v918 = vmul.f32 %v908, %v914
        %v919 = vmul.f32 %v912, %v916
        %v920 = vadd.f32 %v823, %v918
        %v921 = vadd.f32 %v824, %v919
        %s922 = scalar_lea.vmem [#allocation4], 28
        %v923 = vld [vmem:[%s922] sm:$0x7]
        %v925 = vsel %vm264, %v923, 0
        %927 = vmatprep.subr.mxu0 %v248
        %928 = vmatpush1.msra.mxu0 %v247
        %929 = vmatprep.subr.mxu0 %v250
        %930 = vmatpush1.msra.mxu0 %v249
        %931 = vmatprep.subr.mxu0 %v252
        %932 = vmatpush1.msra.mxu0 %v251
        %933 = vmatprep.subr.mxu0 %v254
        %934 = vmatpush1.msra.mxu0 %v253
        %935 = vmatprep.subr.mxu0 %v256
        %936 = vmatpush1.msra.mxu0 %v255
        %937 = vmatprep.subr.mxu0 %v258
        %938 = vmatpush1.msra.mxu0 %v257
        %939 = vmatprep.subr.mxu0 %v260
        %940 = vmatpush1.msra.mxu0 %v259
        %941 = vmatprep.subr.mxu0 %v262
        %942 = vmatpush1.msra.mxu0 %v261
        %943 = vmatprep.subr.mxu0 0.0
        %944 = vmatpush1.msra.mxu0 0.0
        %945 = vmatprep.subr.mxu0 0.0
        %946 = vmatpush1.msra.mxu0 0.0
        %947 = vmatprep.subr.mxu0 0.0
        %948 = vmatpush1.msra.mxu0 0.0
        %949 = vmatprep.subr.mxu0 0.0
        %950 = vmatpush1.msra.mxu0 0.0
        %951 = vmatprep.subr.mxu0 0.0
        %952 = vmatpush1.msra.mxu0 0.0
        %953 = vmatprep.subr.mxu0 0.0
        %954 = vmatpush1.msra.mxu0 0.0
        %955 = vmatprep.subr.mxu0 0.0
        %956 = vmatpush1.msra.mxu0 0.0
        %957 = vmatprep.subr.mxu0 0.0
        %958 = vmatpush1.msra.mxu0 0.0
        %959 = vmatprep.subr.mxu0 0.0
        %960 = vmatpush1.msra.mxu0 0.0
        %961 = vmatprep.subr.mxu0 0.0
        %962 = vmatpush1.msra.mxu0 0.0
        %963 = vmatprep.subr.mxu0 0.0
        %964 = vmatpush1.msra.mxu0 0.0
        %965 = vmatprep.subr.mxu0 0.0
        %966 = vmatpush1.msra.mxu0 0.0
        %967 = vmatprep.subr.mxu0 0.0
        %968 = vmatpush1.msra.mxu0 0.0
        %969 = vmatprep.subr.mxu0 0.0
        %970 = vmatpush1.msra.mxu0 0.0
        %971 = vmatprep.subr.mxu0 0.0
        %972 = vmatpush1.msra.mxu0 0.0
        %973 = vmatprep.subr.mxu0 0.0
        %974 = vmatpush1.msra.mxu0 0.0
        %975 = vmatprep.subr.mxu0 0.0
        %976 = vmatpush1.msra.mxu0 0.0
        %977 = vmatprep.subr.mxu0 0.0
        %978 = vmatpush1.msra.mxu0 0.0
        %979 = vmatprep.subr.mxu0 0.0
        %980 = vmatpush1.msra.mxu0 0.0
        %981 = vmatprep.subr.mxu0 0.0
        %982 = vmatpush1.msra.mxu0 0.0
        %983 = vmatprep.subr.mxu0 0.0
        %984 = vmatpush1.msra.mxu0 0.0
        %985 = vmatprep.subr.mxu0 0.0
        %986 = vmatpush1.msra.mxu0 0.0
        %987 = vmatprep.subr.mxu0 0.0
        %988 = vmatpush1.msra.mxu0 0.0
        %989 = vmatprep.subr.mxu0 0.0
        %990 = vmatpush1.msra.mxu0 0.0
        %991 = vmatprep.mubr.f32.mxu0 0.0
        %992 = vmatmul.mubr.f32.gmra.mrb[0].mxu0 %v925
        %v993 = vpop.f32.mrb[0].mxu0
        %v994 = vadd.f32 0.0, %v993
        %v995 = vpop.f32.mrb[0].mxu0
        %v996 = vadd.f32 0.0, %v995
        %997 = vdwg.mxu0
        %1000 = vrot.lane.b32.xlu0 %v994, 112
        %v1001 = vpop.permute.xlu0 %1000
        %1002 = vrot.lane.b32.xlu0 %v996, 112
        %v1003 = vpop.permute.xlu0 %1002
        %vm1004 = vcmask 916480
        %v1005 = vsel %vm1004, %v1001, %v1003
        %v1009 = vsel %vm1004, %v1003, %v1001
        %s1010 = scalar_lea.vmem [#allocation6], 56
        %v1011 = vld [vmem:[%s1010] sm:$0x77]
        %v1013 = vcombine.high %v1011, %v1011
        %v1015 = vmul.f32 %v1005, %v1011
        %v1016 = vmul.f32 %v1009, %v1013
        %v1017 = vadd.f32 %v920, %v1015
        %v1018 = vadd.f32 %v921, %v1016
        %s1019 = scalar_lea.vmem [#allocation4], 32
        %v1020 = vld [vmem:[%s1019] sm:$0x7]
        %v1022 = vsel %vm264, %v1020, 0
        %1024 = vmatprep.subr.mxu0 %v248
        %1025 = vmatpush1.msra.mxu0 %v247
        %1026 = vmatprep.subr.mxu0 %v250
        %1027 = vmatpush1.msra.mxu0 %v249
        %1028 = vmatprep.subr.mxu0 %v252
        %1029 = vmatpush1.msra.mxu0 %v251
        %1030 = vmatprep.subr.mxu0 %v254
        %1031 = vmatpush1.msra.mxu0 %v253
        %1032 = vmatprep.subr.mxu0 %v256
        %1033 = vmatpush1.msra.mxu0 %v255
        %1034 = vmatprep.subr.mxu0 %v258
        %1035 = vmatpush1.msra.mxu0 %v257
        %1036 = vmatprep.subr.mxu0 %v260
        %1037 = vmatpush1.msra.mxu0 %v259
        %1038 = vmatprep.subr.mxu0 %v262
        %1039 = vmatpush1.msra.mxu0 %v261
        %1040 = vmatprep.subr.mxu0 0.0
        %1041 = vmatpush1.msra.mxu0 0.0
        %1042 = vmatprep.subr.mxu0 0.0
        %1043 = vmatpush1.msra.mxu0 0.0
        %1044 = vmatprep.subr.mxu0 0.0
        %1045 = vmatpush1.msra.mxu0 0.0
        %1046 = vmatprep.subr.mxu0 0.0
        %1047 = vmatpush1.msra.mxu0 0.0
        %1048 = vmatprep.subr.mxu0 0.0
        %1049 = vmatpush1.msra.mxu0 0.0
        %1050 = vmatprep.subr.mxu0 0.0
        %1051 = vmatpush1.msra.mxu0 0.0
        %1052 = vmatprep.subr.mxu0 0.0
        %1053 = vmatpush1.msra.mxu0 0.0
        %1054 = vmatprep.subr.mxu0 0.0
        %1055 = vmatpush1.msra.mxu0 0.0
        %1056 = vmatprep.subr.mxu0 0.0
        %1057 = vmatpush1.msra.mxu0 0.0
        %1058 = vmatprep.subr.mxu0 0.0
        %1059 = vmatpush1.msra.mxu0 0.0
        %1060 = vmatprep.subr.mxu0 0.0
        %1061 = vmatpush1.msra.mxu0 0.0
        %1062 = vmatprep.subr.mxu0 0.0
        %1063 = vmatpush1.msra.mxu0 0.0
        %1064 = vmatprep.subr.mxu0 0.0
        %1065 = vmatpush1.msra.mxu0 0.0
        %1066 = vmatprep.subr.mxu0 0.0
        %1067 = vmatpush1.msra.mxu0 0.0
        %1068 = vmatprep.subr.mxu0 0.0
        %1069 = vmatpush1.msra.mxu0 0.0
        %1070 = vmatprep.subr.mxu0 0.0
        %1071 = vmatpush1.msra.mxu0 0.0
        %1072 = vmatprep.subr.mxu0 0.0
        %1073 = vmatpush1.msra.mxu0 0.0
        %1074 = vmatprep.subr.mxu0 0.0
        %1075 = vmatpush1.msra.mxu0 0.0
        %1076 = vmatprep.subr.mxu0 0.0
        %1077 = vmatpush1.msra.mxu0 0.0
        %1078 = vmatprep.subr.mxu0 0.0
        %1079 = vmatpush1.msra.mxu0 0.0
        %1080 = vmatprep.subr.mxu0 0.0
        %1081 = vmatpush1.msra.mxu0 0.0
        %1082 = vmatprep.subr.mxu0 0.0
        %1083 = vmatpush1.msra.mxu0 0.0
        %1084 = vmatprep.subr.mxu0 0.0
        %1085 = vmatpush1.msra.mxu0 0.0
        %1086 = vmatprep.subr.mxu0 0.0
        %1087 = vmatpush1.msra.mxu0 0.0
        %1088 = vmatprep.mubr.f32.mxu0 0.0
        %1089 = vmatmul.mubr.f32.gmra.mrb[0].mxu0 %v1022
        %v1090 = vpop.f32.mrb[0].mxu0
        %v1091 = vadd.f32 0.0, %v1090
        %v1092 = vpop.f32.mrb[0].mxu0
        %v1093 = vadd.f32 0.0, %v1092
        %1094 = vdwg.mxu0
        %1097 = vrot.lane.b32.xlu0 %v1091, 111
        %v1098 = vpop.permute.xlu0 %1097
        %1099 = vrot.lane.b32.xlu0 %v1093, 111
        %v1100 = vpop.permute.xlu0 %1099
        %vm1101 = vcmask 908288
        %v1102 = vsel %vm1101, %v1098, %v1100
        %v1106 = vsel %vm1101, %v1100, %v1098
        %s1107 = scalar_lea.vmem [#allocation6], 64
        %v1108 = vld [vmem:[%s1107] sm:$0x77]
        %v1110 = vcombine.high %v1108, %v1108
        %v1112 = vmul.f32 %v1102, %v1108
        %v1113 = vmul.f32 %v1106, %v1110
        %v1114 = vadd.f32 %v1017, %v1112
        %v1115 = vadd.f32 %v1018, %v1113
        %v1116 = vld [vmem:[%s2] sm:$0x7]
        %1118 = vset.pattern.permute.xlu0 0
        %1119 = vperm.xlu0 %1118, %v1116
        %v1120 = vpop.permute.xlu0 %1119
        %v1122 = vadd.f32 %v1114, %v1120
        %v1123 = vadd.f32 %v1115, %v1120
        %v1126 = vcombine.low %v1122, %v1123
        %1128 = vst [vmem:[%s246] sm:$0x77] %v1126
        %p1129 = scmp.lt.s32.totalorder %s19, 1
        %s1130 = scalar_select %p1129, %s19, 1
        %s1131 = smul.addr %s1130, 2
        %s1132 = smul.addr %s1131, 4
        %s1133 = scalar_lea.vmem %s4, %s1132
        // Predicated region
        $region49: #{tpu_custom_call.1} parent=35 // pred_check
          %p1134 = pneg %p126
        $region50: #{tpu_custom_call.1} parent=35 // pred_check_branch
          %1136 = sbr.rel (%p1134) target = $region52
        $region51: #{tpu_custom_call.1} parent=35 // pred_region
          _
        $region52: #{tpu_custom_call.1} parent=35 // pred_fallthru
          _
      $region36: #{tpu_custom_call.1} parent=5 // pred_fallthru
        _
      %p1137 = scmp.le.s32.totalorder 2, %s14
      // Predicated region
      $region53: #{tpu_custom_call.1} parent=5 // pred_check
        %p1138 = pneg %p1137
      $region54: #{tpu_custom_call.1} parent=5 // pred_check_branch
        %1140 = sbr.rel (%p1138) target = $region56
      $region55: #{tpu_custom_call.1} parent=5 // pred_region
        %s1141 = ssub.s32 %s14, 2
        // Predicated region
        $region57: #{tpu_custom_call.1} parent=55 // pred_check
          %p1142 = pneg %p132
        $region58: #{tpu_custom_call.1} parent=55 // pred_check_branch
          %1144 = sbr.rel (%p1142) target = $region60
        $region59: #{tpu_custom_call.1} parent=55 // pred_region
          %p1145 = scmp.lt.s32.totalorder %s20, 1
          %s1146 = scalar_select %p1145, %s20, 1
          %s1147 = smul.addr %s1146, 2
          %s1148 = smul.addr %s1147, 4
          %s1149 = scalar_lea.vmem %s4, %s1148
        $region60: #{tpu_custom_call.1} parent=55 // pred_fallthru
          _
      $region56: #{tpu_custom_call.1} parent=5 // pred_fallthru
        _
    $region6: #{tpu_custom_call.1} parent=1 // loop_footer
      %s18 = sadd.s32 1, %s14
    $region7: #{tpu_custom_call.1} parent=1 // loop_footer_branch
      %13 = sbr.rel target = $region3
    $region8: #{tpu_custom_call.1} parent=1 // loop_exit
      _
    %1150 = vsyncpa [#allocation3], 1
    %s1151 = scalar_lea.sflag [#allocation3], 1
    %1152 = vsyncpa %s1151, 1
    %1153 = vsyncpa [#allocation5], 1

</llo_original>
